<compile_context>
chip_gen: v6e
topology: v6e:2x2x1
jax: 0.10.0
libtpu: 0.0.40
codegen_flags: <defaults>
</compile_context>

<pallas_src>
import functools

import jax
import jax.numpy as jnp
from jax.experimental import pallas as pl
from jax.experimental.pallas import tpu as pltpu

LANE = 128
MAX_TILE_ROWS = 4096      # (4096, 128) f32 block = 2 MiB; 4 MiB double-buffered
ACC_ROWS = 32             # resident accumulator rows per core (4 f32 vregs)
TARGET = 0.0              # myLoss fixes self.target = FloatTensor([0])


def _sumsq_kernel(x_ref, out_ref, *, target, tile_rows, total_rows,
                  blocks_per_core, blocks_total, needs_mask):
    """Accumulate per-lane partial sums of (x - target)^2 into the resident
    (ACC_ROWS, 128) f32 output block owned by this core slice."""
    c = pl.program_id(0)          # TensorCore split ("parallel")
    i = pl.program_id(1)          # reduction steps for this core ("arbitrary")
    acc_rows = out_ref.shape[0]

    @pl.when(i == 0)
    def _():
        out_ref[...] = jnp.zeros_like(out_ref)

    x = x_ref[...].astype(jnp.float32)       # in-kernel cast (native dtype streamed)
    if target == 0.0:
        sq = x * x                           # trace-time special case: no subtract
    else:
        d = x - jnp.float32(target)
        sq = d * d

    def fold(vals):
        # Pure-VPU folding into `acc_rows` independent accumulator rows.
        full = (tile_rows // acc_rows) * acc_rows
        if full:
            out_ref[...] += vals[:full].reshape(full // acc_rows, acc_rows,
                                                LANE).sum(axis=0)
        if tile_rows - full:
            # Tiny single-block leftover (< acc_rows rows): reduce across
            # sublanes and deposit into accumulator row 0 with a select, so we
            # never need a sub-(8,128) partial store.
            extra = jnp.sum(vals[full:], axis=0)[None, :]            # (1, LANE)
            row0 = jax.lax.broadcasted_iota(jnp.int32,
                                            (acc_rows, LANE), 0) == 0
            out_ref[...] += jnp.where(row0, extra, 0.0)

    if needs_mask:
        b = c * blocks_per_core + i          # logical (unclamped) block index

        @pl.when(b < blocks_total - 1)       # full blocks: unmasked hot path
        def _():
            fold(sq)

        @pl.when(b == blocks_total - 1)      # the (possibly partial) last block
        def _():
            row_ids = b * tile_rows + jax.lax.broadcasted_iota(
                jnp.int32, (tile_rows, LANE), 0)
            fold(jnp.where(row_ids < total_rows, sq, 0.0))
        # b > blocks_total - 1: replayed clamped block -> skip entirely.
    else:
        fold(sq)


def _my_loss_impl(outputs):
    x = outputs.reshape(-1)
    n = x.size
    if n == 0:
        return jnp.float32(jnp.nan)          # torch.mean of empty -> nan

    rows = n // LANE
    rem = n % LANE
    aligned = rows * LANE

    # Sub-128-element tail: tiny plain-JAX reduction fused with the epilogue
    # (no full-tensor pad / concatenate copy).
    if rem:
        tail = x[aligned:].astype(jnp.float32)
        if TARGET == 0.0:
            tail_sum = jnp.sum(tail * tail)
        else:
            tail_sum = jnp.sum(jnp.square(tail - jnp.float32(TARGET)))
    else:
        tail_sum = jnp.float32(0.0)

    if rows == 0:
        # Fewer than 128 elements total: the tail reduction is the whole loss.
        return tail_sum / n

    x2d = (x if rem == 0 else x[:aligned]).reshape(rows, LANE)  # free for aligned n

    tile_rows = rows if rows <= MAX_TILE_ROWS else MAX_TILE_ROWS
    blocks_total = pl.cdiv(rows, tile_rows)
    num_cores = 2 if blocks_total >= 2 else 1     # skip the split for tiny inputs
    blocks_per_core = pl.cdiv(blocks_total, num_cores)
    needs_mask = (num_cores * blocks_per_core * tile_rows) != rows

    kernel = functools.partial(
        _sumsq_kernel,
        target=TARGET,
        tile_rows=tile_rows,
        total_rows=rows,
        blocks_per_core=blocks_per_core,
        blocks_total=blocks_total,
        needs_mask=needs_mask,
    )

    cost = pl.CostEstimate(
        flops=2 * rows * LANE,
        bytes_accessed=rows * LANE * x.dtype.itemsize
        + num_cores * ACC_ROWS * LANE * 4,
        transcendentals=0,
    )

    partials = pl.pallas_call(
        kernel,
        out_shape=jax.ShapeDtypeStruct((num_cores * ACC_ROWS, LANE), jnp.float32),
        grid=(num_cores, blocks_per_core),
        in_specs=[
            pl.BlockSpec(
                (tile_rows, LANE),
                # Clamp so the DMA never reads a fully out-of-bounds block;
                # replayed blocks are skipped in-kernel.
                lambda c, i: (jnp.minimum(c * blocks_per_core + i,
                                          blocks_total - 1), 0),
            )
        ],
        out_specs=pl.BlockSpec((ACC_ROWS, LANE), lambda c, i: (c, 0)),
        compiler_params=pltpu.CompilerParams(
            dimension_semantics=("parallel", "arbitrary"),
        ),
        cost_estimate=cost,
    )(x2d)

    # Final tiny cross-lane reduce + mean (<= 64x128 f32) in plain JAX.
    return (jnp.sum(partials) + tail_sum) / n


my_loss = jax.jit(_my_loss_impl)


if __name__ == "__main__":
    key = jax.random.PRNGKey(0)

    # Primary case: typical small NCHW "outputs" tensor fed to the loss.
    outputs = jax.random.normal(key, (2, 4, 16, 16), dtype=jnp.float32)
    loss = jax.block_until_ready(my_loss(outputs))
    ref = jnp.mean(jnp.square(outputs - TARGET))
    assert jnp.allclose(loss, ref, rtol=1e-5, atol=1e-6), (loss, ref)

    # Larger case exercising 4096-row blocks, the 2-core split, the masked
    # partial last block, and a replayed (skipped) block.
    outputs2 = jax.random.normal(jax.random.PRNGKey(1), (4, 16, 128, 130),
                                 dtype=jnp.float32)
    loss2 = jax.block_until_ready(my_loss(outputs2))
    ref2 = jnp.mean(jnp.square(outputs2 - TARGET))
    assert jnp.allclose(loss2, ref2, rtol=1e-4, atol=1e-6), (loss2, ref2)

    # Unaligned numel: <128-element tail path + non-multiple-of-32 row count.
    outputs3 = jax.random.normal(jax.random.PRNGKey(2), (3, 5, 7, 11),
                                 dtype=jnp.float32)
    loss3 = jax.block_until_ready(my_loss(outputs3))
    ref3 = jnp.mean(jnp.square(outputs3 - TARGET))
    assert jnp.allclose(loss3, ref3, rtol=1e-5, atol=1e-6), (loss3, ref3)

    print("KERNEL_OK")
</pallas_src>

<mosaic_0001>
module attributes {stable_mosaic.version = 11 : i64} {
  func.func @_sumsq_kernel(%arg0: i32, %arg1: i32, %arg2: memref<16x128xf32, #tpu.memory_space<vmem>>, %arg3: memref<32x128xf32, #tpu.memory_space<vmem>>) attributes {dimension_semantics = [#tpu.dimension_semantics<parallel>, #tpu.dimension_semantics<arbitrary>], iteration_bounds = array<i64: 1, 1>, scalar_prefetch = 0 : i64, scratch_operands = 0 : i64, tpu.core_type = #tpu.core_type<tc>, window_params = [{transform_indices = @transform_0, window_bounds = array<i64: 16, 128>}, {transform_indices = @transform_1, window_bounds = array<i64: 32, 128>}]} {
    %c0_i32 = arith.constant 0 : i32
    %0 = arith.cmpi eq, %arg1, %c0_i32 : i32
    %1 = arith.extui %0 : i1 to i32
    %c0_i32_0 = arith.constant 0 : i32
    %2 = arith.cmpi ne, %1, %c0_i32_0 : i32
    scf.if %2 {
      %cst_8 = arith.constant 0.000000e+00 : f32
      %17 = vector.broadcast %cst_8 : f32 to vector<32x128xf32>
      %c0_9 = arith.constant 0 : index
      %c0_10 = arith.constant 0 : index
      %18 = vector.load %arg3[%c0_9, %c0_10] : memref<32x128xf32, #tpu.memory_space<vmem>>, vector<32x128xf32>
      tpu.vector_store %arg3[%c0_9, %c0_10], %17 {strides = array<i32>} : memref<32x128xf32, #tpu.memory_space<vmem>>, vector<32x128xf32>,
    } else {
    }
    %c0 = arith.constant 0 : index
    %c0_1 = arith.constant 0 : index
    %3 = vector.load %arg2[%c0, %c0_1] : memref<16x128xf32, #tpu.memory_space<vmem>>, vector<16x128xf32>
    %4 = arith.mulf %3, %3 : vector<16x128xf32>
    %cst = arith.constant dense<0.000000e+00> : vector<128xf32>
    %5 = vector.multi_reduction <add>, %4, %cst [0] : vector<16x128xf32> to vector<128xf32>
    %6 = vector.shape_cast %5 : vector<128xf32> to vector<1x128xf32>
    %7 = tpu.iota {dimensions = array<i32: 0>} : vector<32x128xi32>
    %c0_i32_2 = arith.constant 0 : i32
    %8 = vector.broadcast %c0_i32_2 : i32 to vector<32x128xi32>
    %9 = arith.cmpi eq, %7, %8 : vector<32x128xi32>
    %c0_3 = arith.constant 0 : index
    %c0_4 = arith.constant 0 : index
    %10 = vector.load %arg3[%c0_3, %c0_4] : memref<32x128xf32, #tpu.memory_space<vmem>>, vector<32x128xf32>
    %cst_5 = arith.constant 0.000000e+00 : f32
    %11 = vector.shape_cast %6 : vector<1x128xf32> to vector<1x128xf32>
    %12 = vector.broadcast %11 : vector<1x128xf32> to vector<32x128xf32>
    %13 = vector.broadcast %cst_5 : f32 to vector<32x128xf32>
    %14 = arith.select %9, %12, %13 : vector<32x128xi1>, vector<32x128xf32>
    %15 = arith.addf %10, %14 : vector<32x128xf32>
    %c0_6 = arith.constant 0 : index
    %c0_7 = arith.constant 0 : index
    %16 = vector.load %arg3[%c0_6, %c0_7] : memref<32x128xf32, #tpu.memory_space<vmem>>, vector<32x128xf32>
    tpu.vector_store %arg3[%c0_6, %c0_7], %15 {strides = array<i32>} : memref<32x128xf32, #tpu.memory_space<vmem>>, vector<32x128xf32>,
    return
  }
  func.func @transform_0(%arg0: i32, %arg1: i32) -> (i32, i32) {
    %c1_i32 = arith.constant 1 : i32
    %0 = arith.muli %arg0, %c1_i32 : i32
    %1 = arith.addi %0, %arg1 : i32
    %c0_i32 = arith.constant 0 : i32
    %2 = arith.minsi %1, %c0_i32 : i32
    %c0_i32_0 = arith.constant 0 : i32
    %c0_i32_1 = arith.constant 0 : i32
    return %2, %c0_i32_0 : i32, i32
  }
  func.func @transform_1(%arg0: i32, %arg1: i32) -> (i32, i32) {
    %c0_i32 = arith.constant 0 : i32
    %c0_i32_0 = arith.constant 0 : i32
    return %arg0, %c0_i32 : i32, i32
  }
}

</mosaic_0001>

<llo_original>
// kernel: _my_loss_impl.1
$region0: #{_my_loss_impl.1}
  #allocation0 [shape = 'u32[]', space=smem, size = 0x4, offset = 0x4, fixed_abs, tag = 'smem constant byte address 0x4 - core index']
  #allocation1 [shape = 'u32[144,128]{1,0:T(1,128)}', space=vmem, size = 0x12000, scoped, tag = 'internal scratch']
  %s0 = inlined_call_operand.vmem [shape: f32[16,128], index: 0, kind: input, shape index: {}]
  %s1 = inlined_call_operand.vmem [shape: f32[32,128], index: 1, kind: output, shape index: {}]
  %s2 = sld [smem:[#allocation0]]
  $region18: #{_my_loss_impl.1} parent=0
    _
  %s4 = ssub.s32 1, %s2
  %s5 = scalar_select 0, %s4, %s2
  // Predicated region
  $region2: #{_my_loss_impl.1} parent=0 // pred_check
    _
  $region3: #{_my_loss_impl.1} parent=0 // pred_check_branch
    %7 = sbr.rel (0) target = $region5
  $region4: #{_my_loss_impl.1} parent=0 // pred_region
    %s8 = sadd.s32 0, 0
    %p9 = scmp.lt.s32.totalorder %s8, 0
    %s10 = scalar_select %p9, %s8, 0
    %s11 = smul.u32 2, %s10
    %p12 = scmp.lt.s32.totalorder %s11, 1
    %s13 = scalar_select %p12, %s11, 1
    %s14 = smul.addr %s13, 8
    %s15 = scalar_lea.vmem %s0, %s14
    %s16 = sadd.s32 0, 0
    %p17 = scmp.lt.s32.totalorder %s16, 0
    %s18 = scalar_select %p17, %s16, 0
    %s19 = smul.u32 2, %s18
  $region5: #{_my_loss_impl.1} parent=0 // pred_fallthru
    _
  %s20 = sadd.s32 0, 0
  %p21 = scmp.lt.s32.totalorder %s20, 0
  %s22 = scalar_select %p21, %s20, 0
  %s23 = smul.u32 2, %s22
  %p24 = scmp.lt.s32.totalorder %s23, 1
  %s25 = scalar_select %p24, %s23, 1
  %s26 = smul.addr %s25, 8
  %s27 = scalar_lea.vmem %s0, %s26
  %s28 = sadd.s32 0, 0
  %p29 = scmp.lt.s32.totalorder %s28, 0
  %s30 = scalar_select %p29, %s28, 0
  %s31 = smul.u32 2, %s30
  %p32 = scmp.lt.s32.totalorder %s31, 1
  %s33 = scalar_select %p32, %s31, 1
  %s34 = smul.addr %s33, 8
  %s35 = scalar_lea.vmem %s0, %s34
  %s36 = sadd.s32 0, 0
  %p37 = scmp.lt.s32.totalorder %s36, 0
  %s38 = scalar_select %p37, %s36, 0
  %s39 = smul.u32 2, %s38
  %p40 = scmp.eq.s32.totalorder 0, 0
  // Predicated region
  $region6: #{_my_loss_impl.1} parent=0 // pred_check
    %p41 = pneg %p40
  $region7: #{_my_loss_impl.1} parent=0 // pred_check_branch
    %43 = sbr.rel (%p41) target = $region9
  $region8: #{_my_loss_impl.1} parent=0 // pred_region
    %44 = vst [vmem:[%s1] sm:$0xff] 0.0
    %45 = vst [vmem:[%s1 + $0x8] sm:$0xff] 0.0
    %46 = vst [vmem:[%s1 + $0x10] sm:$0xff] 0.0
    %47 = vst [vmem:[%s1 + $0x18] sm:$0xff] 0.0
  $region9: #{_my_loss_impl.1} parent=0 // pred_fallthru
    _
  %v48 = vld [vmem:[%s35] sm:$0xff]
  %v49 = vld [vmem:[%s35 + $0x8] sm:$0xff]
  %v50 = vmul.f32 %v48, %v48
  %v51 = vmul.f32 %v49, %v49
  %v52 = vadd.f32 %v50, %v51
  %v53 = vrot.slane %v52, 4
  %v54 = vadd.f32 %v52, %v53
  %v55 = vrot.slane %v54, 2
  %v56 = vadd.f32 %v54, %v55
  %v57 = vrot.slane %v56, 1
  %v58 = vadd.f32 %v56, %v57
  %v59 = vlaneseq
  %v60 = vshrl.u32 %v59, 7
  %v61 = vadd.s32 %v60, 8
  %v62 = vadd.s32 %v60, 16
  %v63 = vadd.s32 %v60, 24
  %vm64 = vcmp.eq.s32.totalorder %v60, 0
  %vm65 = vcmp.eq.s32.totalorder %v61, 0
  %vm66 = vcmp.eq.s32.totalorder %v62, 0
  %vm67 = vcmp.eq.s32.totalorder %v63, 0
  %v68 = vld [vmem:[%s1] sm:$0xff]
  %v69 = vld [vmem:[%s1 + $0x8] sm:$0xff]
  %v70 = vld [vmem:[%s1 + $0x10] sm:$0xff]
  %v71 = vld [vmem:[%s1 + $0x18] sm:$0xff]
  %v72 = vsel %vm64, %v58, 0.0
  %v73 = vsel %vm65, %v58, 0.0
  %v74 = vsel %vm66, %v58, 0.0
  %v75 = vsel %vm67, %v58, 0.0
  %v76 = vadd.f32 %v68, %v72
  %v77 = vadd.f32 %v69, %v73
  %v78 = vadd.f32 %v70, %v74
  %v79 = vadd.f32 %v71, %v75
  %80 = vst [vmem:[%s1] sm:$0xff] %v76
  %81 = vst [vmem:[%s1 + $0x8] sm:$0xff] %v77
  %82 = vst [vmem:[%s1 + $0x10] sm:$0xff] %v78
  %83 = vst [vmem:[%s1 + $0x18] sm:$0xff] %v79
  // Predicated region
  $region10: #{_my_loss_impl.1} parent=0 // pred_check
    _
  $region11: #{_my_loss_impl.1} parent=0 // pred_check_branch
    %85 = sbr.rel (0) target = $region13
  $region12: #{_my_loss_impl.1} parent=0 // pred_region
    _
  $region13: #{_my_loss_impl.1} parent=0 // pred_fallthru
    _
  // Predicated region
  $region14: #{_my_loss_impl.1} parent=0 // pred_check
    _
  $region15: #{_my_loss_impl.1} parent=0 // pred_check_branch
    %87 = sbr.rel (0) target = $region17
  $region16: #{_my_loss_impl.1} parent=0 // pred_region
    _
  $region17: #{_my_loss_impl.1} parent=0 // pred_fallthru
    _

</llo_original>
